<compile_context>
chip_gen: v7x
topology: tpu7x:2x2x1
jax: 0.10.0
libtpu: 0.0.40
codegen_flags: <defaults>
</compile_context>

<pallas_src>
import math

import jax
import jax.numpy as jnp
from jax import lax
from jax.experimental import pallas as pl
from jax.experimental.pallas import tpu as pltpu

NEG_BIG = -1000000000.0


def _fast_recip(x):
    # EUP approx reciprocal (free bundle slot) + one Newton-Raphson refinement:
    # avoids the VPU divide while keeping ~f32 accuracy on the result.
    r = pl.reciprocal(x, approx=True)
    return r * (2.0 - x * r)


def _explore_kernel(all_ref, last_ref, seq_ref, maskb_ref,
                    w_uw_ref, b_uw_ref, ve_wt_ref, ew_t_ref,
                    out_ref):
    # Per grid step (one block of Bb batch rows):
    #   all_ref   : (Bb*S, H)  all_memory, flattened
    #   last_ref  : (Bb, H)    last_memory
    #   seq_ref   : (Bb, L)    item ids (int32)
    #   maskb_ref : (Bb*S, 1)  additive mask bias (0 for valid, -1e9 for masked)
    #   w_uw_ref  : (2H, H)    [Ue^T ; We^T]
    #   b_uw_ref  : (1, H)     ue_b + we_b
    #   ve_wt_ref : (H, 1)     Ve weight^T
    #   ew_t_ref  : (2H, N)    explore weight^T
    #   out_ref   : (Bb, N)    explore probabilities
    f32 = jnp.float32
    bbs, hidden = all_ref.shape
    bb, seq_len_items = seq_ref.shape
    n_items = out_ref.shape[1]
    s = bbs // bb

    all_vals = all_ref[...]                                              # (Bb*S, H)
    last_vals = last_ref[...]                                            # (Bb, H)

    # --- Ue / We projections (dropout == identity), split into two matmuls ---
    h_all = jnp.dot(all_vals, w_uw_ref[0:hidden, :],
                    preferred_element_type=f32)                          # (Bb*S, H)
    # Biases (ue_b + we_b) are folded here so the expansion matmul below
    # broadcasts them per position for free.
    we_proj = jnp.dot(last_vals, w_uw_ref[hidden:, :],
                      preferred_element_type=f32) + b_uw_ref[...]        # (Bb, H)

    # Segment-selection matrices built from iotas (pure VPU, no transposes):
    #   sel   (Bb, Bb*S): sel[b, r]   = 1 iff flattened row r belongs to batch b
    #   sel_t (Bb*S, Bb): its transpose, constructed directly
    r_iota = lax.broadcasted_iota(jnp.int32, (bb, bbs), 1)
    b_iota = lax.broadcasted_iota(jnp.int32, (bb, bbs), 0)
    seg = r_iota - b_iota * s
    sel = jnp.logical_and(seg >= 0, seg < s).astype(f32)

    r_iota_t = lax.broadcasted_iota(jnp.int32, (bbs, bb), 0)
    b_iota_t = lax.broadcasted_iota(jnp.int32, (bbs, bb), 1)
    seg_t = r_iota_t - b_iota_t * s
    sel_t = jnp.logical_and(seg_t >= 0, seg_t < s).astype(f32)

    # Expand We(last)+bias across each batch's S rows on the (idle) MXU.
    we_exp = jnp.dot(sel_t, we_proj, preferred_element_type=f32)         # (Bb*S, H)
    h = jnp.tanh(h_all + we_exp)

    # Ve scores via the MXU + additive mask bias.  Ve's scalar bias is dropped:
    # a constant added to every valid score before the per-batch softmax leaves
    # alpha unchanged, and masked positions are pushed to ~-1e9 regardless.
    scores = jnp.dot(h, ve_wt_ref[...],
                     preferred_element_type=f32) + maskb_ref[...]        # (Bb*S, 1)

    # Per-batch softmax over seq positions in the flattened layout.  A single
    # global max (>= every per-batch max) is used as the exp shift; scores are
    # tanh-bounded (|score| <= sum|ve_w|), so this is exact unless
    # 2*sum|ve_w| > ~87 (f32 exp underflow), far outside this module's weight
    # scales.  denom is guarded so a fully-masked row cannot produce NaN.
    m = jnp.max(scores, axis=0, keepdims=True)
    e = jnp.exp(scores - m)                                              # (Bb*S, 1)

    denom = jnp.dot(sel, e, preferred_element_type=f32)                  # (Bb, 1)
    sums = jnp.dot(sel, all_vals.astype(f32) * e,
                   preferred_element_type=f32)                           # (Bb, H)
    out_e = sums * _fast_recip(jnp.maximum(denom, 1e-30))                # (Bb, H)

    # Explore logits: two matmuls on static slices of ew^T (no lane concat).
    w_dtype = ew_t_ref.dtype
    logits = (jnp.dot(out_e.astype(w_dtype), ew_t_ref[0:hidden, :],
                      preferred_element_type=f32)
              + jnp.dot(last_vals, ew_t_ref[hidden:, :],
                        preferred_element_type=f32))                     # (Bb, N)

    # scatter_add_(-1e9) at item_seq positions.  Duplicates add repeatedly in
    # the reference; post-softmax that is indistinguishable from a single hit,
    # so accumulate a boolean and apply -1e9 once.
    iota_n = lax.broadcasted_iota(jnp.int32, (bb, n_items), 1)
    seq = seq_ref[...]                                                   # (Bb, L)
    hit = iota_n == seq[:, 0:1]
    for l in range(1, seq_len_items):                                    # static L
        hit = jnp.logical_or(hit, iota_n == seq[:, l:l + 1])
    logits = jnp.where(hit, logits + NEG_BIG, logits)

    # Final stable softmax over the item (lane) axis; dense (Bb, N) store.
    m2 = jnp.max(logits, axis=1, keepdims=True)
    e2 = jnp.exp(logits - m2)
    out_ref[...] = e2 * _fast_recip(jnp.sum(e2, axis=1, keepdims=True))


def explore_decoder_forward(all_memory, last_memory, item_seq, mask, params,
                            *, num_batch_blocks=1, use_bf16=False):
    """Pallas forward.

    num_batch_blocks=1 (default): one fat step — best on single-TC chips
    (v5e / v6e) and for small batches.  Only use num_batch_blocks=2 (v7x
    megacore) when the per-block batch stays >= 8 sublane-aligned rows and the
    per-block work is compute-bound; for large num_item prefer sharding along
    the item axis instead (see TODO at top).  use_bf16=True feeds the bf16
    MXU on v6e/v7x (f32 accumulation retained).
    """
    B, S, H = all_memory.shape
    L = item_seq.shape[1]
    N = params["ew"].shape[0]

    G = num_batch_blocks
    if B % G != 0:
        raise ValueError("num_batch_blocks must divide the batch size")
    Bb = B // G
    if G != 1 and Bb % 8 != 0:
        raise ValueError("per-block batch must be a multiple of 8 (sublane tile)")

    in_dtype = jnp.bfloat16 if use_bf16 else jnp.float32

    # Parameter / layout plumbing only (transposes, stacking).  No broadcast or
    # concat of activation-sized tensors happens in the wrapper.
    w_uw = jnp.concatenate([params["ue_w"].T, params["we_w"].T],
                           axis=0).astype(in_dtype)                      # (2H, H)
    b_uw = (params["ue_b"] + params["we_b"]).reshape(1, H).astype(jnp.float32)
    ve_wt = params["ve_w"].reshape(1, H).T.astype(jnp.float32)           # (H, 1)
    # NOTE: params["ve_b"] is intentionally not passed — a constant shift of
    # all valid scores before the per-sequence softmax cannot change alpha.
    ew_t = params["ew"].T.astype(in_dtype)                               # (2H, N)

    all_flat = all_memory.reshape(B * S, H).astype(in_dtype)
    last_in = last_memory.astype(in_dtype)
    mask_bias = jnp.where(mask.reshape(B * S, 1) == 0,
                          NEG_BIG, 0.0).astype(jnp.float32)
    seq2d = item_seq.astype(jnp.int32)

    operands = (all_flat, last_in, seq2d, mask_bias, w_uw, b_uw, ve_wt, ew_t)

    flops = (2 * B * S * H * H            # Ue projection
             + 2 * B * H * H              # We projection
             + 2 * B * S * Bb * H         # sel_t expansion of We(last)
             + 2 * B * S * H              # Ve scores
             + 2 * Bb * B * S * (1 + H)   # segment-sum matmuls (denom + sums)
             + 4 * B * H * N)             # explore (two H-deep matmuls)
    transcendentals = B * S * H + B * S + B * N + 2 * B
    bytes_accessed = int(sum(int(x.size) * x.dtype.itemsize
                             for x in operands)) + 4 * B * N

    out = pl.pallas_call(
        _explore_kernel,
        out_shape=jax.ShapeDtypeStruct((B, N), jnp.float32),
        grid_spec=pltpu.PrefetchScalarGridSpec(
            num_scalar_prefetch=0,
            grid=(G,),
            in_specs=[
                pl.BlockSpec((Bb * S, H), lambda i: (i, 0)),   # all_memory (flat)
                pl.BlockSpec((Bb, H), lambda i: (i, 0)),       # last_memory
                pl.BlockSpec((Bb, L), lambda i: (i, 0)),       # item_seq
                pl.BlockSpec((Bb * S, 1), lambda i: (i, 0)),   # additive mask bias
                pl.BlockSpec((2 * H, H), lambda i: (0, 0)),    # [Ue^T ; We^T]
                pl.BlockSpec((1, H), lambda i: (0, 0)),        # ue_b + we_b
                pl.BlockSpec((H, 1), lambda i: (0, 0)),        # Ve weight^T
                pl.BlockSpec((2 * H, N), lambda i: (0, 0)),    # explore weight^T
            ],
            out_specs=pl.BlockSpec((Bb, N), lambda i: (i, 0)),
        ),
        compiler_params=pltpu.CompilerParams(
            dimension_semantics=("parallel",),
            vmem_limit_bytes=32 * 1024 * 1024),
        cost_estimate=pl.CostEstimate(flops=flops,
                                      transcendentals=transcendentals,
                                      bytes_accessed=bytes_accessed),
    )(*operands)
    return out


def reference_forward(all_memory, last_memory, item_seq, mask, params):
    """Pure-JAX mirror of the PyTorch forward (dropout == identity)."""
    ue = all_memory @ params["ue_w"].T + params["ue_b"]
    we = last_memory @ params["we_w"].T + params["we_b"]
    h = jnp.tanh(ue + we[:, None, :])
    scores = jnp.sum(h * params["ve_w"][0], axis=-1) + params["ve_b"][0]   # (B, S)
    scores = jnp.where(mask == 0, NEG_BIG, scores)
    alpha = jax.nn.softmax(scores, axis=1)[..., None]
    out_e = jnp.sum(alpha * all_memory, axis=1)
    cat = jnp.concatenate([out_e, last_memory], axis=1)
    logits = cat @ params["ew"].T
    B = logits.shape[0]
    rows = jnp.arange(B)[:, None]
    logits = logits.at[rows, item_seq].add(NEG_BIG)
    return jax.nn.softmax(logits, axis=1)


def _uniform(key, shape, fan_in):
    bound = 1.0 / math.sqrt(fan_in)
    return jax.random.uniform(key, shape, jnp.float32, -bound, bound)


if __name__ == "__main__":
    B, S, H, N = 8, 8, 32, 256       # batch, seq_len, hidden_size, num_item
    L = S                            # item_seq length == seq_len

    key = jax.random.PRNGKey(0)
    ks = jax.random.split(key, 12)

    params = {
        "ue_w": _uniform(ks[0], (H, H), H),
        "ue_b": _uniform(ks[1], (H,), H),
        "we_w": _uniform(ks[2], (H, H), H),
        "we_b": _uniform(ks[3], (H,), H),
        "ve_w": _uniform(ks[4], (1, H), H),
        "ve_b": _uniform(ks[5], (1,), H),
        "ew":   _uniform(ks[6], (N, 2 * H), 2 * H),   # matrix_for_explore.weight
    }

    all_memory = jax.random.normal(ks[7], (B, S, H), jnp.float32)
    last_memory = jax.random.normal(ks[8], (B, H), jnp.float32)
    item_seq = jax.random.randint(ks[9], (B, L), 0, N).astype(jnp.int32)
    lengths = jax.random.randint(ks[10], (B,), 1, S + 1)
    mask = (jnp.arange(S)[None, :] < lengths[:, None]).astype(jnp.int32)

    out = explore_decoder_forward(all_memory, last_memory, item_seq, mask, params)
    out = jax.block_until_ready(out)

    ref = reference_forward(all_memory, last_memory, item_seq, mask, params)
    assert out.shape == (B, N)
    assert jnp.allclose(out, ref, rtol=1e-4, atol=1e-5), "mismatch vs reference"

    print("KERNEL_OK")
</pallas_src>

<mosaic_0001>
module attributes {stable_mosaic.version = 11 : i64} {
  func.func @_explore_kernel(%arg0: i32, %arg1: memref<64x32xf32, #tpu.memory_space<vmem>>, %arg2: memref<8x32xf32, #tpu.memory_space<vmem>>, %arg3: memref<8x8xi32, #tpu.memory_space<vmem>>, %arg4: memref<64x1xf32, #tpu.memory_space<vmem>>, %arg5: memref<64x32xf32, #tpu.memory_space<vmem>>, %arg6: memref<1x32xf32, #tpu.memory_space<vmem>>, %arg7: memref<32x1xf32, #tpu.memory_space<vmem>>, %arg8: memref<64x256xf32, #tpu.memory_space<vmem>>, %arg9: memref<8x256xf32, #tpu.memory_space<vmem>>) attributes {dimension_semantics = [#tpu.dimension_semantics<parallel>], iteration_bounds = array<i64: 1>, scalar_prefetch = 0 : i64, scratch_operands = 0 : i64, tpu.core_type = #tpu.core_type<tc>, window_params = [{transform_indices = @transform_0, window_bounds = array<i64: 64, 32>}, {transform_indices = @transform_1, window_bounds = array<i64: 8, 32>}, {transform_indices = @transform_2, window_bounds = array<i64: 8, 8>}, {transform_indices = @transform_3, window_bounds = array<i64: 64, 1>}, {pipeline_mode = #tpu.pipeline_mode<synchronous>, transform_indices = @transform_4, window_bounds = array<i64: 64, 32>}, {pipeline_mode = #tpu.pipeline_mode<synchronous>, transform_indices = @transform_5, window_bounds = array<i64: 1, 32>}, {pipeline_mode = #tpu.pipeline_mode<synchronous>, transform_indices = @transform_6, window_bounds = array<i64: 32, 1>}, {pipeline_mode = #tpu.pipeline_mode<synchronous>, transform_indices = @transform_7, window_bounds = array<i64: 64, 256>}, {transform_indices = @transform_8, window_bounds = array<i64: 8, 256>}]} {
    %c0 = arith.constant 0 : index
    %c0_0 = arith.constant 0 : index
    %0 = vector.load %arg1[%c0, %c0_0] : memref<64x32xf32, #tpu.memory_space<vmem>>, vector<64x32xf32>
    %c0_1 = arith.constant 0 : index
    %c0_2 = arith.constant 0 : index
    %1 = vector.load %arg2[%c0_1, %c0_2] : memref<8x32xf32, #tpu.memory_space<vmem>>, vector<8x32xf32>
    %c0_3 = arith.constant 0 : index
    %c0_4 = arith.constant 0 : index
    %2 = vector.load %arg5[%c0_3, %c0_4] : memref<64x32xf32, #tpu.memory_space<vmem>>, vector<32x32xf32>
    %cst = arith.constant dense<0.000000e+00> : vector<64x32xf32>
    %3 = tpu.matmul %0, %2, %cst {dimension_numbers = #tpu.dot_dimension_numbers<[1], [0], [0], [1], [0, 0, 1, 1], [], []>} : vector<64x32xf32>, vector<32x32xf32>, vector<64x32xf32> -> vector<64x32xf32>
    %c32 = arith.constant 32 : index
    %c0_5 = arith.constant 0 : index
    %4 = vector.load %arg5[%c32, %c0_5] : memref<64x32xf32, #tpu.memory_space<vmem>>, vector<32x32xf32>
    %cst_6 = arith.constant dense<0.000000e+00> : vector<8x32xf32>
    %5 = tpu.matmul %1, %4, %cst_6 {dimension_numbers = #tpu.dot_dimension_numbers<[1], [0], [0], [1], [0, 0, 1, 1], [], []>} : vector<8x32xf32>, vector<32x32xf32>, vector<8x32xf32> -> vector<8x32xf32>
    %c0_7 = arith.constant 0 : index
    %c0_8 = arith.constant 0 : index
    %6 = vector.load %arg6[%c0_7, %c0_8] : memref<1x32xf32, #tpu.memory_space<vmem>>, vector<1x32xf32>
    %7 = vector.broadcast %6 : vector<1x32xf32> to vector<8x32xf32>
    %8 = arith.addf %5, %7 : vector<8x32xf32>
    %9 = tpu.iota {dimensions = array<i32: 1>} : vector<8x64xi32>
    %10 = tpu.iota {dimensions = array<i32: 0>} : vector<8x64xi32>
    %c8_i32 = arith.constant 8 : i32
    %11 = vector.broadcast %c8_i32 : i32 to vector<8x64xi32>
    %12 = arith.muli %10, %11 : vector<8x64xi32>
    %13 = arith.subi %9, %12 : vector<8x64xi32>
    %c0_i32 = arith.constant 0 : i32
    %14 = vector.broadcast %c0_i32 : i32 to vector<8x64xi32>
    %15 = arith.cmpi sge, %13, %14 : vector<8x64xi32>
    %c8_i32_9 = arith.constant 8 : i32
    %16 = vector.broadcast %c8_i32_9 : i32 to vector<8x64xi32>
    %17 = arith.cmpi slt, %13, %16 : vector<8x64xi32>
    %18 = arith.andi %15, %17 : vector<8x64xi1>
    %19 = arith.extui %18 : vector<8x64xi1> to vector<8x64xi32>
    %20 = arith.sitofp %19 : vector<8x64xi32> to vector<8x64xf32>
    %21 = tpu.iota {dimensions = array<i32: 0>} : vector<64x8xi32>
    %22 = tpu.iota {dimensions = array<i32: 1>} : vector<64x8xi32>
    %c8_i32_10 = arith.constant 8 : i32
    %23 = vector.broadcast %c8_i32_10 : i32 to vector<64x8xi32>
    %24 = arith.muli %22, %23 : vector<64x8xi32>
    %25 = arith.subi %21, %24 : vector<64x8xi32>
    %c0_i32_11 = arith.constant 0 : i32
    %26 = vector.broadcast %c0_i32_11 : i32 to vector<64x8xi32>
    %27 = arith.cmpi sge, %25, %26 : vector<64x8xi32>
    %c8_i32_12 = arith.constant 8 : i32
    %28 = vector.broadcast %c8_i32_12 : i32 to vector<64x8xi32>
    %29 = arith.cmpi slt, %25, %28 : vector<64x8xi32>
    %30 = arith.andi %27, %29 : vector<64x8xi1>
    %31 = arith.extui %30 : vector<64x8xi1> to vector<64x8xi32>
    %32 = arith.sitofp %31 : vector<64x8xi32> to vector<64x8xf32>
    %cst_13 = arith.constant dense<0.000000e+00> : vector<64x32xf32>
    %33 = tpu.matmul %32, %8, %cst_13 {dimension_numbers = #tpu.dot_dimension_numbers<[1], [0], [0], [1], [0, 0, 1, 1], [], []>} : vector<64x8xf32>, vector<8x32xf32>, vector<64x32xf32> -> vector<64x32xf32>
    %34 = arith.addf %3, %33 : vector<64x32xf32>
    %35 = math.tanh %34 : vector<64x32xf32>
    %c0_14 = arith.constant 0 : index
    %c0_15 = arith.constant 0 : index
    %36 = vector.load %arg7[%c0_14, %c0_15] : memref<32x1xf32, #tpu.memory_space<vmem>>, vector<32x1xf32>
    %cst_16 = arith.constant dense<0.000000e+00> : vector<64x1xf32>
    %37 = tpu.matmul %35, %36, %cst_16 {dimension_numbers = #tpu.dot_dimension_numbers<[1], [0], [0], [1], [0, 0, 1, 1], [], []>} : vector<64x32xf32>, vector<32x1xf32>, vector<64x1xf32> -> vector<64x1xf32>
    %c0_17 = arith.constant 0 : index
    %c0_18 = arith.constant 0 : index
    %38 = vector.load %arg4[%c0_17, %c0_18] : memref<64x1xf32, #tpu.memory_space<vmem>>, vector<64x1xf32>
    %39 = arith.addf %37, %38 : vector<64x1xf32>
    %cst_19 = arith.constant dense<0xFF800000> : vector<1xf32>
    %40 = vector.multi_reduction <maximumf>, %39, %cst_19 [0] : vector<64x1xf32> to vector<1xf32>
    %41 = vector.shape_cast %40 : vector<1xf32> to vector<1x1xf32>
    %42 = vector.broadcast %41 : vector<1x1xf32> to vector<64x1xf32>
    %43 = arith.subf %39, %42 : vector<64x1xf32>
    %44 = math.exp %43 : vector<64x1xf32>
    %cst_20 = arith.constant dense<0.000000e+00> : vector<8x1xf32>
    %45 = tpu.matmul %20, %44, %cst_20 {dimension_numbers = #tpu.dot_dimension_numbers<[1], [0], [0], [1], [0, 0, 1, 1], [], []>} : vector<8x64xf32>, vector<64x1xf32>, vector<8x1xf32> -> vector<8x1xf32>
    %46 = vector.broadcast %44 : vector<64x1xf32> to vector<64x32xf32>
    %47 = arith.mulf %0, %46 : vector<64x32xf32>
    %cst_21 = arith.constant dense<0.000000e+00> : vector<8x32xf32>
    %48 = tpu.matmul %20, %47, %cst_21 {dimension_numbers = #tpu.dot_dimension_numbers<[1], [0], [0], [1], [0, 0, 1, 1], [], []>} : vector<8x64xf32>, vector<64x32xf32>, vector<8x32xf32> -> vector<8x32xf32>
    %cst_22 = arith.constant 1.000000e-30 : f32
    %49 = vector.broadcast %cst_22 : f32 to vector<8x1xf32>
    %50 = arith.maximumf %45, %49 : vector<8x1xf32>
    %51 = tpu.reciprocal %50 {approx = true} : vector<8x1xf32> -> vector<8x1xf32>
    %52 = arith.mulf %50, %51 : vector<8x1xf32>
    %cst_23 = arith.constant 2.000000e+00 : f32
    %53 = vector.broadcast %cst_23 : f32 to vector<8x1xf32>
    %54 = arith.subf %53, %52 : vector<8x1xf32>
    %55 = arith.mulf %51, %54 : vector<8x1xf32>
    %56 = vector.broadcast %55 : vector<8x1xf32> to vector<8x32xf32>
    %57 = arith.mulf %48, %56 : vector<8x32xf32>
    %c0_24 = arith.constant 0 : index
    %c0_25 = arith.constant 0 : index
    %58 = vector.load %arg8[%c0_24, %c0_25] : memref<64x256xf32, #tpu.memory_space<vmem>>, vector<32x256xf32>
    %cst_26 = arith.constant dense<0.000000e+00> : vector<8x256xf32>
    %59 = tpu.matmul %57, %58, %cst_26 {dimension_numbers = #tpu.dot_dimension_numbers<[1], [0], [0], [1], [0, 0, 1, 1], [], []>} : vector<8x32xf32>, vector<32x256xf32>, vector<8x256xf32> -> vector<8x256xf32>
    %c32_27 = arith.constant 32 : index
    %c0_28 = arith.constant 0 : index
    %60 = vector.load %arg8[%c32_27, %c0_28] : memref<64x256xf32, #tpu.memory_space<vmem>>, vector<32x256xf32>
    %cst_29 = arith.constant dense<0.000000e+00> : vector<8x256xf32>
    %61 = tpu.matmul %1, %60, %cst_29 {dimension_numbers = #tpu.dot_dimension_numbers<[1], [0], [0], [1], [0, 0, 1, 1], [], []>} : vector<8x32xf32>, vector<32x256xf32>, vector<8x256xf32> -> vector<8x256xf32>
    %62 = arith.addf %59, %61 : vector<8x256xf32>
    %63 = tpu.iota {dimensions = array<i32: 1>} : vector<8x256xi32>
    %c0_30 = arith.constant 0 : index
    %c0_31 = arith.constant 0 : index
    %64 = vector.load %arg3[%c0_30, %c0_31] : memref<8x8xi32, #tpu.memory_space<vmem>>, vector<8x8xi32>
    %65 = vector.extract_strided_slice %64 {offsets = [0, 0], sizes = [8, 1], strides = [1, 1]} : vector<8x8xi32> to vector<8x1xi32>
    %66 = vector.broadcast %65 : vector<8x1xi32> to vector<8x256xi32>
    %67 = arith.cmpi eq, %63, %66 : vector<8x256xi32>
    %68 = vector.extract_strided_slice %64 {offsets = [0, 1], sizes = [8, 1], strides = [1, 1]} : vector<8x8xi32> to vector<8x1xi32>
    %69 = vector.broadcast %68 : vector<8x1xi32> to vector<8x256xi32>
    %70 = arith.cmpi eq, %63, %69 : vector<8x256xi32>
    %71 = arith.ori %67, %70 : vector<8x256xi1>
    %72 = vector.extract_strided_slice %64 {offsets = [0, 2], sizes = [8, 1], strides = [1, 1]} : vector<8x8xi32> to vector<8x1xi32>
    %73 = vector.broadcast %72 : vector<8x1xi32> to vector<8x256xi32>
    %74 = arith.cmpi eq, %63, %73 : vector<8x256xi32>
    %75 = arith.ori %71, %74 : vector<8x256xi1>
    %76 = vector.extract_strided_slice %64 {offsets = [0, 3], sizes = [8, 1], strides = [1, 1]} : vector<8x8xi32> to vector<8x1xi32>
    %77 = vector.broadcast %76 : vector<8x1xi32> to vector<8x256xi32>
    %78 = arith.cmpi eq, %63, %77 : vector<8x256xi32>
    %79 = arith.ori %75, %78 : vector<8x256xi1>
    %80 = vector.extract_strided_slice %64 {offsets = [0, 4], sizes = [8, 1], strides = [1, 1]} : vector<8x8xi32> to vector<8x1xi32>
    %81 = vector.broadcast %80 : vector<8x1xi32> to vector<8x256xi32>
    %82 = arith.cmpi eq, %63, %81 : vector<8x256xi32>
    %83 = arith.ori %79, %82 : vector<8x256xi1>
    %84 = vector.extract_strided_slice %64 {offsets = [0, 5], sizes = [8, 1], strides = [1, 1]} : vector<8x8xi32> to vector<8x1xi32>
    %85 = vector.broadcast %84 : vector<8x1xi32> to vector<8x256xi32>
    %86 = arith.cmpi eq, %63, %85 : vector<8x256xi32>
    %87 = arith.ori %83, %86 : vector<8x256xi1>
    %88 = vector.extract_strided_slice %64 {offsets = [0, 6], sizes = [8, 1], strides = [1, 1]} : vector<8x8xi32> to vector<8x1xi32>
    %89 = vector.broadcast %88 : vector<8x1xi32> to vector<8x256xi32>
    %90 = arith.cmpi eq, %63, %89 : vector<8x256xi32>
    %91 = arith.ori %87, %90 : vector<8x256xi1>
    %92 = vector.extract_strided_slice %64 {offsets = [0, 7], sizes = [8, 1], strides = [1, 1]} : vector<8x8xi32> to vector<8x1xi32>
    %93 = vector.broadcast %92 : vector<8x1xi32> to vector<8x256xi32>
    %94 = arith.cmpi eq, %63, %93 : vector<8x256xi32>
    %95 = arith.ori %91, %94 : vector<8x256xi1>
    %cst_32 = arith.constant -1.000000e+09 : f32
    %96 = vector.broadcast %cst_32 : f32 to vector<8x256xf32>
    %97 = arith.addf %62, %96 : vector<8x256xf32>
    %98 = arith.select %95, %97, %62 : vector<8x256xi1>, vector<8x256xf32>
    %cst_33 = arith.constant dense<0xFF800000> : vector<8xf32>
    %99 = vector.multi_reduction <maximumf>, %98, %cst_33 [1] : vector<8x256xf32> to vector<8xf32>
    %100 = vector.shape_cast %99 : vector<8xf32> to vector<8x1xf32>
    %101 = vector.broadcast %100 : vector<8x1xf32> to vector<8x256xf32>
    %102 = arith.subf %98, %101 : vector<8x256xf32>
    %103 = math.exp %102 : vector<8x256xf32>
    %cst_34 = arith.constant dense<0.000000e+00> : vector<8xf32>
    %104 = vector.multi_reduction <add>, %103, %cst_34 [1] : vector<8x256xf32> to vector<8xf32>
    %105 = vector.shape_cast %104 : vector<8xf32> to vector<8x1xf32>
    %106 = tpu.reciprocal %105 {approx = true} : vector<8x1xf32> -> vector<8x1xf32>
    %107 = arith.mulf %105, %106 : vector<8x1xf32>
    %cst_35 = arith.constant 2.000000e+00 : f32
    %108 = vector.broadcast %cst_35 : f32 to vector<8x1xf32>
    %109 = arith.subf %108, %107 : vector<8x1xf32>
    %110 = arith.mulf %106, %109 : vector<8x1xf32>
    %111 = vector.broadcast %110 : vector<8x1xf32> to vector<8x256xf32>
    %112 = arith.mulf %103, %111 : vector<8x256xf32>
    %c0_36 = arith.constant 0 : index
    %c0_37 = arith.constant 0 : index
    %113 = vector.load %arg9[%c0_36, %c0_37] : memref<8x256xf32, #tpu.memory_space<vmem>>, vector<8x256xf32>
    tpu.vector_store %arg9[%c0_36, %c0_37], %112 {strides = array<i32>} : memref<8x256xf32, #tpu.memory_space<vmem>>, vector<8x256xf32>,
    return
  }
  func.func @transform_0(%arg0: i32) -> (i32, i32) {
    %c0_i32 = arith.constant 0 : i32
    %c0_i32_0 = arith.constant 0 : i32
    return %arg0, %c0_i32 : i32, i32
  }
  func.func @transform_1(%arg0: i32) -> (i32, i32) {
    %c0_i32 = arith.constant 0 : i32
    %c0_i32_0 = arith.constant 0 : i32
    return %arg0, %c0_i32 : i32, i32
  }
  func.func @transform_2(%arg0: i32) -> (i32, i32) {
    %c0_i32 = arith.constant 0 : i32
    %c0_i32_0 = arith.constant 0 : i32
    return %arg0, %c0_i32 : i32, i32
  }
  func.func @transform_3(%arg0: i32) -> (i32, i32) {
    %c0_i32 = arith.constant 0 : i32
    %c0_i32_0 = arith.constant 0 : i32
    return %arg0, %c0_i32 : i32, i32
  }
  func.func @transform_4(%arg0: i32) -> (i32, i32) {
    %c0_i32 = arith.constant 0 : i32
    %c0_i32_0 = arith.constant 0 : i32
    %c0_i32_1 = arith.constant 0 : i32
    return %c0_i32, %c0_i32_0 : i32, i32
  }
  func.func @transform_5(%arg0: i32) -> (i32, i32) {
    %c0_i32 = arith.constant 0 : i32
    %c0_i32_0 = arith.constant 0 : i32
    %c0_i32_1 = arith.constant 0 : i32
    return %c0_i32, %c0_i32_0 : i32, i32
  }
  func.func @transform_6(%arg0: i32) -> (i32, i32) {
    %c0_i32 = arith.constant 0 : i32
    %c0_i32_0 = arith.constant 0 : i32
    %c0_i32_1 = arith.constant 0 : i32
    return %c0_i32, %c0_i32_0 : i32, i32
  }
  func.func @transform_7(%arg0: i32) -> (i32, i32) {
    %c0_i32 = arith.constant 0 : i32
    %c0_i32_0 = arith.constant 0 : i32
    %c0_i32_1 = arith.constant 0 : i32
    return %c0_i32, %c0_i32_0 : i32, i32
  }
  func.func @transform_8(%arg0: i32) -> (i32, i32) {
    %c0_i32 = arith.constant 0 : i32
    %c0_i32_0 = arith.constant 0 : i32
    return %arg0, %c0_i32 : i32, i32
  }
}

</mosaic_0001>

<llo_original>
// kernel: tpu_custom_call.1
$region0: #{tpu_custom_call.1}
  #allocation0 [shape = 'u32[]', space=smem, size = 0x4, offset = 0x4, fixed_abs, tag = 'smem constant byte address 0x4 - core index']
  #allocation1 [shape = 'u32[144,128]{1,0:T(1,128)}', space=vmem, size = 0x12000, scoped, tag = 'internal scratch']
  %s0 = inlined_call_operand.vmem [shape: f32[64,32], index: 0, kind: input, shape index: {}]
  %s1 = inlined_call_operand.vmem [shape: f32[8,32], index: 1, kind: input, shape index: {}]
  %s2 = inlined_call_operand.vmem [shape: s32[8,8], index: 2, kind: input, shape index: {}]
  %s3 = inlined_call_operand.vmem [shape: f32[64,1], index: 3, kind: input, shape index: {}]
  %s4 = inlined_call_operand.vmem [shape: f32[64,32], index: 4, kind: input, shape index: {}]
  %s5 = inlined_call_operand.vmem [shape: f32[1,32], index: 5, kind: input, shape index: {}]
  %s6 = inlined_call_operand.vmem [shape: f32[32,1], index: 6, kind: input, shape index: {}]
  %s7 = inlined_call_operand.vmem [shape: f32[64,256], index: 7, kind: input, shape index: {}]
  %s8 = inlined_call_operand.hbm [shape: f32[8,256], index: 8, kind: output, shape index: {}]
  %s9 = sld [smem:[#allocation0]]
  $region42: #{tpu_custom_call.1} parent=0
    _
  %s11 = ssub.s32 1, %s9
  %s12 = scalar_select 0, %s11, %s9
  $region1: #{tpu_custom_call.1} parent=0
    #allocation2 [shape = 'u8[8192]{0}', space=vmem, size = 0x2000, scoped, tag = 'output window, operand 0, single buffered']
    #allocation3 [shape = 's32[1]{0}', space=sflag, size = 0x4, scoped, tag = 'scoped memory for tpu_custom_call.1']
    %13 = vsyncpa [#allocation3], 0
    // Predicated region
    $region2: #{tpu_custom_call.1} parent=1 // pred_check
      _
    $region3: #{tpu_custom_call.1} parent=1 // pred_check_branch
      %15 = sbr.rel (0) target = $region5
    $region4: #{tpu_custom_call.1} parent=1 // pred_region
      _
    $region5: #{tpu_custom_call.1} parent=1 // pred_fallthru
      _
    // Predicated region
    $region6: #{tpu_custom_call.1} parent=1 // pred_check
      _
    $region7: #{tpu_custom_call.1} parent=1 // pred_check_branch
      %17 = sbr.rel (0) target = $region9
    $region8: #{tpu_custom_call.1} parent=1 // pred_region
      _
    $region9: #{tpu_custom_call.1} parent=1 // pred_fallthru
      _
    // Predicated region
    $region10: #{tpu_custom_call.1} parent=1 // pred_check
      _
    $region11: #{tpu_custom_call.1} parent=1 // pred_check_branch
      %19 = sbr.rel (0) target = $region13
    $region12: #{tpu_custom_call.1} parent=1 // pred_region
      _
    $region13: #{tpu_custom_call.1} parent=1 // pred_fallthru
      _
    // Predicated region
    $region14: #{tpu_custom_call.1} parent=1 // pred_check
      _
    $region15: #{tpu_custom_call.1} parent=1 // pred_check_branch
      %21 = sbr.rel (0) target = $region17
    $region16: #{tpu_custom_call.1} parent=1 // pred_region
      _
    $region17: #{tpu_custom_call.1} parent=1 // pred_fallthru
      _
    // Predicated region
    $region18: #{tpu_custom_call.1} parent=1 // pred_check
      _
    $region19: #{tpu_custom_call.1} parent=1 // pred_check_branch
      %23 = sbr.rel (0) target = $region21
    $region20: #{tpu_custom_call.1} parent=1 // pred_region
      _
    $region21: #{tpu_custom_call.1} parent=1 // pred_fallthru
      _
    // Predicated region
    $region22: #{tpu_custom_call.1} parent=1 // pred_check
      _
    $region23: #{tpu_custom_call.1} parent=1 // pred_check_branch
      %25 = sbr.rel (0) target = $region25
    $region24: #{tpu_custom_call.1} parent=1 // pred_region
      _
    $region25: #{tpu_custom_call.1} parent=1 // pred_fallthru
      _
    // Predicated region
    $region26: #{tpu_custom_call.1} parent=1 // pred_check
      _
    $region27: #{tpu_custom_call.1} parent=1 // pred_check_branch
      %27 = sbr.rel (0) target = $region29
    $region28: #{tpu_custom_call.1} parent=1 // pred_region
      _
    $region29: #{tpu_custom_call.1} parent=1 // pred_fallthru
      _
    // Predicated region
    $region30: #{tpu_custom_call.1} parent=1 // pred_check
      _
    $region31: #{tpu_custom_call.1} parent=1 // pred_check_branch
      %29 = sbr.rel (0) target = $region33
    $region32: #{tpu_custom_call.1} parent=1 // pred_region
      _
    $region33: #{tpu_custom_call.1} parent=1 // pred_fallthru
      _
    %v30 = vld [vmem:[%s0] sm:$0xff]
    %v31 = vld [vmem:[%s0 + $0x8] sm:$0xff]
    %v32 = vld [vmem:[%s0 + $0x10] sm:$0xff]
    %v33 = vld [vmem:[%s0 + $0x18] sm:$0xff]
    %v34 = vld [vmem:[%s0 + $0x20] sm:$0xff]
    %v35 = vld [vmem:[%s0 + $0x28] sm:$0xff]
    %v36 = vld [vmem:[%s0 + $0x30] sm:$0xff]
    %v37 = vld [vmem:[%s0 + $0x38] sm:$0xff]
    %v38 = vld [vmem:[%s1] sm:$0xff]
    %v39 = vld [vmem:[%s4] sm:$0xff]
    %v40 = vld [vmem:[%s4 + $0x8] sm:$0xff]
    %v41 = vld [vmem:[%s4 + $0x10] sm:$0xff]
    %v42 = vld [vmem:[%s4 + $0x18] sm:$0xff]
    %v43 = vld [vmem:[%s4 + $0x20] sm:$0xff]
    %v44 = vld [vmem:[%s4 + $0x28] sm:$0xff]
    %v45 = vld [vmem:[%s4 + $0x30] sm:$0xff]
    %v46 = vld [vmem:[%s4 + $0x38] sm:$0xff]
    %v47 = vld [vmem:[%s5] sm:$0x1]
    %v49 = vlaneseq
    %v50 = vshrl.u32 %v49, 7
    %v51 = vsub.s32 0, %v50
    %v52 = vrot.slane %v47, %v51
    %vm54 = vcmask 261120
    %v56 = vsel %vm54, %v38, 0
    %58 = vmatprep.subr.mxu0 0.0
    %59 = vmatpush1.msra.mxu0 %v43
    %60 = vmatprep.subr.mxu0 0.0
    %61 = vmatpush1.msra.mxu0 %v44
    %62 = vmatprep.subr.mxu0 0.0
    %63 = vmatpush1.msra.mxu0 %v45
    %64 = vmatprep.subr.mxu0 0.0
    %65 = vmatpush1.msra.mxu0 %v46
    %66 = vmatprep.subr.mxu0 0.0
    %67 = vmatpush1.msra.mxu0 0.0
    %68 = vmatprep.subr.mxu0 0.0
    %69 = vmatpush1.msra.mxu0 0.0
    %70 = vmatprep.subr.mxu0 0.0
    %71 = vmatpush1.msra.mxu0 0.0
    %72 = vmatprep.subr.mxu0 0.0
    %73 = vmatpush1.msra.mxu0 0.0
    %74 = vmatprep.subr.mxu0 0.0
    %75 = vmatpush1.msra.mxu0 0.0
    %76 = vmatprep.subr.mxu0 0.0
    %77 = vmatpush1.msra.mxu0 0.0
    %78 = vmatprep.subr.mxu0 0.0
    %79 = vmatpush1.msra.mxu0 0.0
    %80 = vmatprep.subr.mxu0 0.0
    %81 = vmatpush1.msra.mxu0 0.0
    %82 = vmatprep.subr.mxu0 0.0
    %83 = vmatpush1.msra.mxu0 0.0
    %84 = vmatprep.subr.mxu0 0.0
    %85 = vmatpush1.msra.mxu0 0.0
    %86 = vmatprep.subr.mxu0 0.0
    %87 = vmatpush1.msra.mxu0 0.0
    %88 = vmatprep.subr.mxu0 0.0
    %89 = vmatpush1.msra.mxu0 0.0
    %90 = vmatprep.subr.mxu0 0.0
    %91 = vmatpush1.msra.mxu0 0.0
    %92 = vmatprep.subr.mxu0 0.0
    %93 = vmatpush1.msra.mxu0 0.0
    %94 = vmatprep.subr.mxu0 0.0
    %95 = vmatpush1.msra.mxu0 0.0
    %96 = vmatprep.subr.mxu0 0.0
    %97 = vmatpush1.msra.mxu0 0.0
    %98 = vmatprep.subr.mxu0 0.0
    %99 = vmatpush1.msra.mxu0 0.0
    %100 = vmatprep.subr.mxu0 0.0
    %101 = vmatpush1.msra.mxu0 0.0
    %102 = vmatprep.subr.mxu0 0.0
    %103 = vmatpush1.msra.mxu0 0.0
    %104 = vmatprep.subr.mxu0 0.0
    %105 = vmatpush1.msra.mxu0 0.0
    %106 = vmatprep.subr.mxu0 0.0
    %107 = vmatpush1.msra.mxu0 0.0
    %108 = vmatprep.subr.mxu0 0.0
    %109 = vmatpush1.msra.mxu0 0.0
    %110 = vmatprep.subr.mxu0 0.0
    %111 = vmatpush1.msra.mxu0 0.0
    %112 = vmatprep.subr.mxu0 0.0
    %113 = vmatpush1.msra.mxu0 0.0
    %114 = vmatprep.subr.mxu0 0.0
    %115 = vmatpush1.msra.mxu0 0.0
    %116 = vmatprep.subr.mxu0 0.0
    %117 = vmatpush1.msra.mxu0 0.0
    %118 = vmatprep.subr.mxu0 0.0
    %119 = vmatpush1.msra.mxu0 0.0
    %120 = vmatprep.subr.mxu0 0.0
    %121 = vmatpush1.msra.mxu0 0.0
    %122 = vmatprep.mubr.f32.mxu0 0.0
    %123 = vmatmul.mubr.f32.gmra.mrb[0].mxu0 %v56
    %v124 = vpop.f32.mrb[0].mxu0
    %v125 = vadd.f32 %v52, %v124
    %v126 = vpop.f32.mrb[0].mxu0
    %127 = vdwg.mxu0
    %v128 = vlaneseq
    %v129 = vand.u32 %v128, 127
    %v130 = vlaneseq
    %v131 = vshrl.u32 %v130, 7
    %v132 = vmul.u32 %v131, 8
    %v133 = vsub.s32 %v129, %v132
    %vm134 = vcmp.ge.s32.totalorder %v133, 0
    %vm135 = vcmp.lt.s32.totalorder %v133, 8
    %vm136 = vmand %vm134, %vm135
    %v137 = vsel %vm136, 1, 0
    %v138 = vcvt.s32.f32 %v137
    %v139 = vadd.s32 %v131, 8
    %v140 = vadd.s32 %v131, 16
    %v141 = vadd.s32 %v131, 24
    %v142 = vadd.s32 %v131, 32
    %v143 = vadd.s32 %v131, 40
    %v144 = vadd.s32 %v131, 48
    %v145 = vadd.s32 %v131, 56
    %v146 = vmul.u32 %v129, 8
    %v147 = vsub.s32 %v131, %v146
    %v148 = vsub.s32 %v139, %v146
    %v149 = vsub.s32 %v140, %v146
    %v150 = vsub.s32 %v141, %v146
    %v151 = vsub.s32 %v142, %v146
    %v152 = vsub.s32 %v143, %v146
    %v153 = vsub.s32 %v144, %v146
    %v154 = vsub.s32 %v145, %v146
    %vm155 = vcmp.ge.s32.totalorder %v147, 0
    %vm156 = vcmp.ge.s32.totalorder %v148, 0
    %vm157 = vcmp.ge.s32.totalorder %v149, 0
    %vm158 = vcmp.ge.s32.totalorder %v150, 0
    %vm159 = vcmp.ge.s32.totalorder %v151, 0
    %vm160 = vcmp.ge.s32.totalorder %v152, 0
    %vm161 = vcmp.ge.s32.totalorder %v153, 0
    %vm162 = vcmp.ge.s32.totalorder %v154, 0
    %vm163 = vcmp.lt.s32.totalorder %v147, 8
    %vm164 = vcmp.lt.s32.totalorder %v148, 8
    %vm165 = vcmp.lt.s32.totalorder %v149, 8
    %vm166 = vcmp.lt.s32.totalorder %v150, 8
    %vm167 = vcmp.lt.s32.totalorder %v151, 8
    %vm168 = vcmp.lt.s32.totalorder %v152, 8
    %vm169 = vcmp.lt.s32.totalorder %v153, 8
    %vm170 = vcmp.lt.s32.totalorder %v154, 8
    %vm171 = vmand %vm155, %vm163
    %vm172 = vmand %vm156, %vm164
    %vm173 = vmand %vm157, %vm165
    %vm174 = vmand %vm158, %vm166
    %vm175 = vmand %vm159, %vm167
    %vm176 = vmand %vm160, %vm168
    %vm177 = vmand %vm161, %vm169
    %vm178 = vmand %vm162, %vm170
    %v179 = vsel %vm171, 1, 0
    %v180 = vsel %vm172, 1, 0
    %v181 = vsel %vm173, 1, 0
    %v182 = vsel %vm174, 1, 0
    %v183 = vsel %vm175, 1, 0
    %v184 = vsel %vm176, 1, 0
    %v185 = vsel %vm177, 1, 0
    %v186 = vsel %vm178, 1, 0
    %v187 = vcvt.s32.f32 %v179
    %v188 = vcvt.s32.f32 %v180
    %v189 = vcvt.s32.f32 %v181
    %v190 = vcvt.s32.f32 %v182
    %v191 = vcvt.s32.f32 %v183
    %v192 = vcvt.s32.f32 %v184
    %v193 = vcvt.s32.f32 %v185
    %v194 = vcvt.s32.f32 %v186
    %vm195 = vcmask 64512
    %v197 = vsel %vm195, %v187, 0
    %v200 = vsel %vm195, %v188, 0
    %v203 = vsel %vm195, %v189, 0
    %v206 = vsel %vm195, %v190, 0
    %v209 = vsel %vm195, %v191, 0
    %v212 = vsel %vm195, %v192, 0
    %v215 = vsel %vm195, %v193, 0
    %v218 = vsel %vm195, %v194, 0
    %220 = vmatprep.subr.mxu0 0.0
    %221 = vmatpush1.msra.mxu0 %v125
    %222 = vmatprep.subr.mxu0 0.0
    %223 = vmatpush1.msra.mxu0 0.0
    %224 = vmatprep.subr.mxu0 0.0
    %225 = vmatpush1.msra.mxu0 0.0
    %226 = vmatprep.subr.mxu0 0.0
    %227 = vmatpush1.msra.mxu0 0.0
    %228 = vmatprep.subr.mxu0 0.0
    %229 = vmatpush1.msra.mxu0 0.0
    %230 = vmatprep.subr.mxu0 0.0
    %231 = vmatpush1.msra.mxu0 0.0
    %232 = vmatprep.subr.mxu0 0.0
    %233 = vmatpush1.msra.mxu0 0.0
    %234 = vmatprep.subr.mxu0 0.0
    %235 = vmatpush1.msra.mxu0 0.0
    %236 = vmatprep.subr.mxu0 0.0
    %237 = vmatpush1.msra.mxu0 0.0
    %238 = vmatprep.subr.mxu0 0.0
    %239 = vmatpush1.msra.mxu0 0.0
    %240 = vmatprep.subr.mxu0 0.0
    %241 = vmatpush1.msra.mxu0 0.0
    %242 = vmatprep.subr.mxu0 0.0
    %243 = vmatpush1.msra.mxu0 0.0
    %244 = vmatprep.subr.mxu0 0.0
    %245 = vmatpush1.msra.mxu0 0.0
    %246 = vmatprep.subr.mxu0 0.0
    %247 = vmatpush1.msra.mxu0 0.0
    %248 = vmatprep.subr.mxu0 0.0
    %249 = vmatpush1.msra.mxu0 0.0
    %250 = vmatprep.subr.mxu0 0.0
    %251 = vmatpush1.msra.mxu0 0.0
    %252 = vmatprep.subr.mxu0 0.0
    %253 = vmatpush1.msra.mxu0 0.0
    %254 = vmatprep.subr.mxu0 0.0
    %255 = vmatpush1.msra.mxu0 0.0
    %256 = vmatprep.subr.mxu0 0.0
    %257 = vmatpush1.msra.mxu0 0.0
    %258 = vmatprep.subr.mxu0 0.0
    %259 = vmatpush1.msra.mxu0 0.0
    %260 = vmatprep.subr.mxu0 0.0
    %261 = vmatpush1.msra.mxu0 0.0
    %262 = vmatprep.subr.mxu0 0.0
    %263 = vmatpush1.msra.mxu0 0.0
    %264 = vmatprep.subr.mxu0 0.0
    %265 = vmatpush1.msra.mxu0 0.0
    %266 = vmatprep.subr.mxu0 0.0
    %267 = vmatpush1.msra.mxu0 0.0
    %268 = vmatprep.subr.mxu0 0.0
    %269 = vmatpush1.msra.mxu0 0.0
    %270 = vmatprep.subr.mxu0 0.0
    %271 = vmatpush1.msra.mxu0 0.0
    %272 = vmatprep.subr.mxu0 0.0
    %273 = vmatpush1.msra.mxu0 0.0
    %274 = vmatprep.subr.mxu0 0.0
    %275 = vmatpush1.msra.mxu0 0.0
    %276 = vmatprep.subr.mxu0 0.0
    %277 = vmatpush1.msra.mxu0 0.0
    %278 = vmatprep.subr.mxu0 0.0
    %279 = vmatpush1.msra.mxu0 0.0
    %280 = vmatprep.subr.mxu0 0.0
    %281 = vmatpush1.msra.mxu0 0.0
    %282 = vmatprep.subr.mxu0 0.0
    %283 = vmatpush1.msra.mxu0 0.0
    %284 = vmatprep.mubr.f32.mxu0 0.0
    %285 = vmatmul.mubr.f32.gmra.mrb[0].mxu0 %v197
    %v286 = vpop.f32.mrb[0].mxu0
    %v287 = vadd.f32 0.0, %v286
    %v288 = vpop.f32.mrb[0].mxu0
    %289 = vmatprep.mubr.f32.mxu0 0.0
    %290 = vmatmul.mubr.f32.gmra.mrb[0].mxu0 %v200
    %v291 = vpop.f32.mrb[0].mxu0
    %v292 = vadd.f32 0.0, %v291
    %v293 = vpop.f32.mrb[0].mxu0
    %294 = vmatprep.mubr.f32.mxu0 0.0
    %295 = vmatmul.mubr.f32.gmra.mrb[0].mxu0 %v203
    %v296 = vpop.f32.mrb[0].mxu0
    %v297 = vadd.f32 0.0, %v296
    %v298 = vpop.f32.mrb[0].mxu0
    %299 = vmatprep.mubr.f32.mxu0 0.0
    %300 = vmatmul.mubr.f32.gmra.mrb[0].mxu0 %v206
    %v301 = vpop.f32.mrb[0].mxu0
    %v302 = vadd.f32 0.0, %v301
    %v303 = vpop.f32.mrb[0].mxu0
    %304 = vmatprep.mubr.f32.mxu0 0.0
    %305 = vmatmul.mubr.f32.gmra.mrb[0].mxu0 %v209
    %v306 = vpop.f32.mrb[0].mxu0
    %v307 = vadd.f32 0.0, %v306
    %v308 = vpop.f32.mrb[0].mxu0
    %309 = vmatprep.mubr.f32.mxu0 0.0
    %310 = vmatmul.mubr.f32.gmra.mrb[0].mxu0 %v212
    %v311 = vpop.f32.mrb[0].mxu0
    %v312 = vadd.f32 0.0, %v311
    %v313 = vpop.f32.mrb[0].mxu0
    %314 = vmatprep.mubr.f32.mxu0 0.0
    %315 = vmatmul.mubr.f32.gmra.mrb[0].mxu0 %v215
    %v316 = vpop.f32.mrb[0].mxu0
    %v317 = vadd.f32 0.0, %v316
    %v318 = vpop.f32.mrb[0].mxu0
    %319 = vmatprep.mubr.f32.mxu0 0.0
    %320 = vmatmul.mubr.f32.gmra.mrb[0].mxu0 %v218
    %v321 = vpop.f32.mrb[0].mxu0
    %v322 = vadd.f32 0.0, %v321
    %v323 = vpop.f32.mrb[0].mxu0
    %324 = vdwg.mxu0
    %v326 = vsel %vm54, %v30, 0
    %v329 = vsel %vm54, %v31, 0
    %v332 = vsel %vm54, %v32, 0
    %v335 = vsel %vm54, %v33, 0
    %v338 = vsel %vm54, %v34, 0
    %v341 = vsel %vm54, %v35, 0
    %v344 = vsel %vm54, %v36, 0
    %v347 = vsel %vm54, %v37, 0
    %349 = vmatprep.subr.mxu0 0.0
    %350 = vmatpush1.msra.mxu0 %v39
    %351 = vmatprep.subr.mxu0 0.0
    %352 = vmatpush1.msra.mxu0 %v40
    %353 = vmatprep.subr.mxu0 0.0
    %354 = vmatpush1.msra.mxu0 %v41
    %355 = vmatprep.subr.mxu0 0.0
    %356 = vmatpush1.msra.mxu0 %v42
    %357 = vmatprep.subr.mxu0 0.0
    %358 = vmatpush1.msra.mxu0 0.0
    %359 = vmatprep.subr.mxu0 0.0
    %360 = vmatpush1.msra.mxu0 0.0
    %361 = vmatprep.subr.mxu0 0.0
    %362 = vmatpush1.msra.mxu0 0.0
    %363 = vmatprep.subr.mxu0 0.0
    %364 = vmatpush1.msra.mxu0 0.0
    %365 = vmatprep.subr.mxu0 0.0
    %366 = vmatpush1.msra.mxu0 0.0
    %367 = vmatprep.subr.mxu0 0.0
    %368 = vmatpush1.msra.mxu0 0.0
    %369 = vmatprep.subr.mxu0 0.0
    %370 = vmatpush1.msra.mxu0 0.0
    %371 = vmatprep.subr.mxu0 0.0
    %372 = vmatpush1.msra.mxu0 0.0
    %373 = vmatprep.subr.mxu0 0.0
    %374 = vmatpush1.msra.mxu0 0.0
    %375 = vmatprep.subr.mxu0 0.0
    %376 = vmatpush1.msra.mxu0 0.0
    %377 = vmatprep.subr.mxu0 0.0
    %378 = vmatpush1.msra.mxu0 0.0
    %379 = vmatprep.subr.mxu0 0.0
    %380 = vmatpush1.msra.mxu0 0.0
    %381 = vmatprep.subr.mxu0 0.0
    %382 = vmatpush1.msra.mxu0 0.0
    %383 = vmatprep.subr.mxu0 0.0
    %384 = vmatpush1.msra.mxu0 0.0
    %385 = vmatprep.subr.mxu0 0.0
    %386 = vmatpush1.msra.mxu0 0.0
    %387 = vmatprep.subr.mxu0 0.0
    %388 = vmatpush1.msra.mxu0 0.0
    %389 = vmatprep.subr.mxu0 0.0
    %390 = vmatpush1.msra.mxu0 0.0
    %391 = vmatprep.subr.mxu0 0.0
    %392 = vmatpush1.msra.mxu0 0.0
    %393 = vmatprep.subr.mxu0 0.0
    %394 = vmatpush1.msra.mxu0 0.0
    %395 = vmatprep.subr.mxu0 0.0
    %396 = vmatpush1.msra.mxu0 0.0
    %397 = vmatprep.subr.mxu0 0.0
    %398 = vmatpush1.msra.mxu0 0.0
    %399 = vmatprep.subr.mxu0 0.0
    %400 = vmatpush1.msra.mxu0 0.0
    %401 = vmatprep.subr.mxu0 0.0
    %402 = vmatpush1.msra.mxu0 0.0
    %403 = vmatprep.subr.mxu0 0.0
    %404 = vmatpush1.msra.mxu0 0.0
    %405 = vmatprep.subr.mxu0 0.0
    %406 = vmatpush1.msra.mxu0 0.0
    %407 = vmatprep.subr.mxu0 0.0
    %408 = vmatpush1.msra.mxu0 0.0
    %409 = vmatprep.subr.mxu0 0.0
    %410 = vmatpush1.msra.mxu0 0.0
    %411 = vmatprep.subr.mxu0 0.0
    %412 = vmatpush1.msra.mxu0 0.0
    %413 = vmatprep.mubr.f32.mxu0 0.0
    %414 = vmatmul.mubr.f32.gmra.mrb[0].mxu0 %v326
    %v415 = vpop.f32.mrb[0].mxu0
    %v416 = vadd.f32 %v287, %v415
    %v417 = vpop.f32.mrb[0].mxu0
    %418 = vmatprep.mubr.f32.mxu0 0.0
    %419 = vmatmul.mubr.f32.gmra.mrb[0].mxu0 %v329
    %v420 = vpop.f32.mrb[0].mxu0
    %v421 = vadd.f32 %v292, %v420
    %v422 = vpop.f32.mrb[0].mxu0
    %423 = vmatprep.mubr.f32.mxu0 0.0
    %424 = vmatmul.mubr.f32.gmra.mrb[0].mxu0 %v332
    %v425 = vpop.f32.mrb[0].mxu0
    %v426 = vadd.f32 %v297, %v425
    %v427 = vpop.f32.mrb[0].mxu0
    %428 = vmatprep.mubr.f32.mxu0 0.0
    %429 = vmatmul.mubr.f32.gmra.mrb[0].mxu0 %v335
    %v430 = vpop.f32.mrb[0].mxu0
    %v431 = vadd.f32 %v302, %v430
    %v432 = vpop.f32.mrb[0].mxu0
    %433 = vmatprep.mubr.f32.mxu0 0.0
    %434 = vmatmul.mubr.f32.gmra.mrb[0].mxu0 %v338
    %v435 = vpop.f32.mrb[0].mxu0
    %v436 = vadd.f32 %v307, %v435
    %v437 = vpop.f32.mrb[0].mxu0
    %438 = vmatprep.mubr.f32.mxu0 0.0
    %439 = vmatmul.mubr.f32.gmra.mrb[0].mxu0 %v341
    %v440 = vpop.f32.mrb[0].mxu0
    %v441 = vadd.f32 %v312, %v440
    %v442 = vpop.f32.mrb[0].mxu0
    %443 = vmatprep.mubr.f32.mxu0 0.0
    %444 = vmatmul.mubr.f32.gmra.mrb[0].mxu0 %v344
    %v445 = vpop.f32.mrb[0].mxu0
    %v446 = vadd.f32 %v317, %v445
    %v447 = vpop.f32.mrb[0].mxu0
    %448 = vmatprep.mubr.f32.mxu0 0.0
    %449 = vmatmul.mubr.f32.gmra.mrb[0].mxu0 %v347
    %v450 = vpop.f32.mrb[0].mxu0
    %v451 = vadd.f32 %v322, %v450
    %v452 = vpop.f32.mrb[0].mxu0
    %453 = vdwg.mxu0
    %v454 = vtanh.pop %v416
    %v455 = vtanh.pop %v421
    %v456 = vtanh.pop %v426
    %v457 = vtanh.pop %v431
    %v458 = vtanh.pop %v436
    %v459 = vtanh.pop %v441
    %v460 = vtanh.pop %v446
    %v461 = vtanh.pop %v451
    %v462 = vld [vmem:[%s6] sm:$0xff]
    %v463 = vld [vmem:[%s6 + $0x8] sm:$0xff]
    %v464 = vld [vmem:[%s6 + $0x10] sm:$0xff]
    %v465 = vld [vmem:[%s6 + $0x18] sm:$0xff]
    %v466 = vld [vmem:[%s3] sm:$0xff]
    %v467 = vld [vmem:[%s3 + $0x8] sm:$0xff]
    %v468 = vld [vmem:[%s3 + $0x10] sm:$0xff]
    %v469 = vld [vmem:[%s3 + $0x18] sm:$0xff]
    %v470 = vld [vmem:[%s3 + $0x20] sm:$0xff]
    %v471 = vld [vmem:[%s3 + $0x28] sm:$0xff]
    %v472 = vld [vmem:[%s3 + $0x30] sm:$0xff]
    %v473 = vld [vmem:[%s3 + $0x38] sm:$0xff]
    %v475 = vsel %vm54, %v454, 0
    %v478 = vsel %vm54, %v455, 0
    %v481 = vsel %vm54, %v456, 0
    %v484 = vsel %vm54, %v457, 0
    %v487 = vsel %vm54, %v458, 0
    %v490 = vsel %vm54, %v459, 0
    %v493 = vsel %vm54, %v460, 0
    %v496 = vsel %vm54, %v461, 0
    %498 = vmatprep.subr.mxu0 0.0
    %499 = vmatpush1.msra.mxu0 %v462
    %500 = vmatprep.subr.mxu0 0.0
    %501 = vmatpush1.msra.mxu0 %v463
    %502 = vmatprep.subr.mxu0 0.0
    %503 = vmatpush1.msra.mxu0 %v464
    %504 = vmatprep.subr.mxu0 0.0
    %505 = vmatpush1.msra.mxu0 %v465
    %506 = vmatprep.subr.mxu0 0.0
    %507 = vmatpush1.msra.mxu0 0.0
    %508 = vmatprep.subr.mxu0 0.0
    %509 = vmatpush1.msra.mxu0 0.0
    %510 = vmatprep.subr.mxu0 0.0
    %511 = vmatpush1.msra.mxu0 0.0
    %512 = vmatprep.subr.mxu0 0.0
    %513 = vmatpush1.msra.mxu0 0.0
    %514 = vmatprep.subr.mxu0 0.0
    %515 = vmatpush1.msra.mxu0 0.0
    %516 = vmatprep.subr.mxu0 0.0
    %517 = vmatpush1.msra.mxu0 0.0
    %518 = vmatprep.subr.mxu0 0.0
    %519 = vmatpush1.msra.mxu0 0.0
    %520 = vmatprep.subr.mxu0 0.0
    %521 = vmatpush1.msra.mxu0 0.0
    %522 = vmatprep.subr.mxu0 0.0
    %523 = vmatpush1.msra.mxu0 0.0
    %524 = vmatprep.subr.mxu0 0.0
    %525 = vmatpush1.msra.mxu0 0.0
    %526 = vmatprep.subr.mxu0 0.0
    %527 = vmatpush1.msra.mxu0 0.0
    %528 = vmatprep.subr.mxu0 0.0
    %529 = vmatpush1.msra.mxu0 0.0
    %530 = vmatprep.subr.mxu0 0.0
    %531 = vmatpush1.msra.mxu0 0.0
    %532 = vmatprep.subr.mxu0 0.0
    %533 = vmatpush1.msra.mxu0 0.0
    %534 = vmatprep.subr.mxu0 0.0
    %535 = vmatpush1.msra.mxu0 0.0
    %536 = vmatprep.subr.mxu0 0.0
    %537 = vmatpush1.msra.mxu0 0.0
    %538 = vmatprep.subr.mxu0 0.0
    %539 = vmatpush1.msra.mxu0 0.0
    %540 = vmatprep.subr.mxu0 0.0
    %541 = vmatpush1.msra.mxu0 0.0
    %542 = vmatprep.subr.mxu0 0.0
    %543 = vmatpush1.msra.mxu0 0.0
    %544 = vmatprep.subr.mxu0 0.0
    %545 = vmatpush1.msra.mxu0 0.0
    %546 = vmatprep.subr.mxu0 0.0
    %547 = vmatpush1.msra.mxu0 0.0
    %548 = vmatprep.subr.mxu0 0.0
    %549 = vmatpush1.msra.mxu0 0.0
    %550 = vmatprep.subr.mxu0 0.0
    %551 = vmatpush1.msra.mxu0 0.0
    %552 = vmatprep.subr.mxu0 0.0
    %553 = vmatpush1.msra.mxu0 0.0
    %554 = vmatprep.subr.mxu0 0.0
    %555 = vmatpush1.msra.mxu0 0.0
    %556 = vmatprep.subr.mxu0 0.0
    %557 = vmatpush1.msra.mxu0 0.0
    %558 = vmatprep.subr.mxu0 0.0
    %559 = vmatpush1.msra.mxu0 0.0
    %560 = vmatprep.subr.mxu0 0.0
    %561 = vmatpush1.msra.mxu0 0.0
    %562 = vmatprep.mubr.f32.mxu0 0.0
    %563 = vmatmul.mubr.f32.gmra.mrb[0].mxu0 %v475
    %v564 = vpop.f32.mrb[0].mxu0
    %v565 = vadd.f32 %v466, %v564
    %v566 = vpop.f32.mrb[0].mxu0
    %567 = vmatprep.mubr.f32.mxu0 0.0
    %568 = vmatmul.mubr.f32.gmra.mrb[0].mxu0 %v478
    %v569 = vpop.f32.mrb[0].mxu0
    %v570 = vadd.f32 %v467, %v569
    %v571 = vpop.f32.mrb[0].mxu0
    %572 = vmatprep.mubr.f32.mxu0 0.0
    %573 = vmatmul.mubr.f32.gmra.mrb[0].mxu0 %v481
    %v574 = vpop.f32.mrb[0].mxu0
    %v575 = vadd.f32 %v468, %v574
    %v576 = vpop.f32.mrb[0].mxu0
    %577 = vmatprep.mubr.f32.mxu0 0.0
    %578 = vmatmul.mubr.f32.gmra.mrb[0].mxu0 %v484
    %v579 = vpop.f32.mrb[0].mxu0
    %v580 = vadd.f32 %v469, %v579
    %v581 = vpop.f32.mrb[0].mxu0
    %582 = vmatprep.mubr.f32.mxu0 0.0
    %583 = vmatmul.mubr.f32.gmra.mrb[0].mxu0 %v487
    %v584 = vpop.f32.mrb[0].mxu0
    %v585 = vadd.f32 %v470, %v584
    %v586 = vpop.f32.mrb[0].mxu0
    %587 = vmatprep.mubr.f32.mxu0 0.0
    %588 = vmatmul.mubr.f32.gmra.mrb[0].mxu0 %v490
    %v589 = vpop.f32.mrb[0].mxu0
    %v590 = vadd.f32 %v471, %v589
    %v591 = vpop.f32.mrb[0].mxu0
    %592 = vmatprep.mubr.f32.mxu0 0.0
    %593 = vmatmul.mubr.f32.gmra.mrb[0].mxu0 %v493
    %v594 = vpop.f32.mrb[0].mxu0
    %v595 = vadd.f32 %v472, %v594
    %v596 = vpop.f32.mrb[0].mxu0
    %597 = vmatprep.mubr.f32.mxu0 0.0
    %598 = vmatmul.mubr.f32.gmra.mrb[0].mxu0 %v496
    %v599 = vpop.f32.mrb[0].mxu0
    %v600 = vadd.f32 %v473, %v599
    %v601 = vpop.f32.mrb[0].mxu0
    %602 = vdwg.mxu0
    %vm603 = vcmask 7168
    %v604 = vsel %vm603, %v565, -inf
    %v605 = vsel %vm603, %v570, -inf
    %v606 = vsel %vm603, %v575, -inf
    %v607 = vsel %vm603, %v580, -inf
    %v608 = vsel %vm603, %v585, -inf
    %v609 = vmax.f32 %v604, %v608
    %v610 = vsel %vm603, %v590, -inf
    %v611 = vmax.f32 %v605, %v610
    %v612 = vsel %vm603, %v595, -inf
    %v613 = vmax.f32 %v606, %v612
    %v614 = vsel %vm603, %v600, -inf
    %v615 = vmax.f32 %v607, %v614
    %v616 = vmax.f32 %v609, %v611
    %v617 = vmax.f32 %v613, %v615
    %v618 = vmax.f32 %v616, %v617
    %v619 = vrot.slane %v618, 4
    %v620 = vmax.f32 %v618, %v619
    %v621 = vrot.slane %v620, 2
    %v622 = vmax.f32 %v620, %v621
    %v623 = vrot.slane %v622, 1
    %v624 = vmax.f32 %v622, %v623
    %v625 = vsub.f32 %v565, %v624
    %v626 = vsub.f32 %v570, %v624
    %v627 = vsub.f32 %v575, %v624
    %v628 = vsub.f32 %v580, %v624
    %v629 = vsub.f32 %v585, %v624
    %v630 = vsub.f32 %v590, %v624
    %v631 = vsub.f32 %v595, %v624
    %v632 = vsub.f32 %v600, %v624
    %v633 = vmul.f32 %v625, 1.442695
    %v634 = vpow.pop %v633
    %v635 = vmul.f32 %v626, 1.442695
    %v636 = vpow.pop %v635
    %v637 = vmul.f32 %v627, 1.442695
    %v638 = vpow.pop %v637
    %v639 = vmul.f32 %v628, 1.442695
    %v640 = vpow.pop %v639
    %v641 = vmul.f32 %v629, 1.442695
    %v642 = vpow.pop %v641
    %v643 = vmul.f32 %v630, 1.442695
    %v644 = vpow.pop %v643
    %v645 = vmul.f32 %v631, 1.442695
    %v646 = vpow.pop %v645
    %v647 = vmul.f32 %v632, 1.442695
    %v648 = vpow.pop %v647
    %vm649 = vcmask 523264
    %v651 = vsel %vm649, %v138, 0
    %653 = vmatprep.subr.mxu0 0.0
    %654 = vmatpush1.msra.mxu0 %v634
    %655 = vmatprep.subr.mxu0 0.0
    %656 = vmatpush1.msra.mxu0 %v636
    %657 = vmatprep.subr.mxu0 0.0
    %658 = vmatpush1.msra.mxu0 %v638
    %659 = vmatprep.subr.mxu0 0.0
    %660 = vmatpush1.msra.mxu0 %v640
    %661 = vmatprep.subr.mxu0 0.0
    %662 = vmatpush1.msra.mxu0 %v642
    %663 = vmatprep.subr.mxu0 0.0
    %664 = vmatpush1.msra.mxu0 %v644
    %665 = vmatprep.subr.mxu0 0.0
    %666 = vmatpush1.msra.mxu0 %v646
    %667 = vmatprep.subr.mxu0 0.0
    %668 = vmatpush1.msra.mxu0 %v648
    %669 = vmatprep.subr.mxu0 0.0
    %670 = vmatpush1.msra.mxu0 0.0
    %671 = vmatprep.subr.mxu0 0.0
    %672 = vmatpush1.msra.mxu0 0.0
    %673 = vmatprep.subr.mxu0 0.0
    %674 = vmatpush1.msra.mxu0 0.0
    %675 = vmatprep.subr.mxu0 0.0
    %676 = vmatpush1.msra.mxu0 0.0
    %677 = vmatprep.subr.mxu0 0.0
    %678 = vmatpush1.msra.mxu0 0.0
    %679 = vmatprep.subr.mxu0 0.0
    %680 = vmatpush1.msra.mxu0 0.0
    %681 = vmatprep.subr.mxu0 0.0
    %682 = vmatpush1.msra.mxu0 0.0
    %683 = vmatprep.subr.mxu0 0.0
    %684 = vmatpush1.msra.mxu0 0.0
    %685 = vmatprep.subr.mxu0 0.0
    %686 = vmatpush1.msra.mxu0 0.0
    %687 = vmatprep.subr.mxu0 0.0
    %688 = vmatpush1.msra.mxu0 0.0
    %689 = vmatprep.subr.mxu0 0.0
    %690 = vmatpush1.msra.mxu0 0.0
    %691 = vmatprep.subr.mxu0 0.0
    %692 = vmatpush1.msra.mxu0 0.0
    %693 = vmatprep.subr.mxu0 0.0
    %694 = vmatpush1.msra.mxu0 0.0
    %695 = vmatprep.subr.mxu0 0.0
    %696 = vmatpush1.msra.mxu0 0.0
    %697 = vmatprep.subr.mxu0 0.0
    %698 = vmatpush1.msra.mxu0 0.0
    %699 = vmatprep.subr.mxu0 0.0
    %700 = vmatpush1.msra.mxu0 0.0
    %701 = vmatprep.subr.mxu0 0.0
    %702 = vmatpush1.msra.mxu0 0.0
    %703 = vmatprep.subr.mxu0 0.0
    %704 = vmatpush1.msra.mxu0 0.0
    %705 = vmatprep.subr.mxu0 0.0
    %706 = vmatpush1.msra.mxu0 0.0
    %707 = vmatprep.subr.mxu0 0.0
    %708 = vmatpush1.msra.mxu0 0.0
    %709 = vmatprep.subr.mxu0 0.0
    %710 = vmatpush1.msra.mxu0 0.0
    %711 = vmatprep.subr.mxu0 0.0
    %712 = vmatpush1.msra.mxu0 0.0
    %713 = vmatprep.subr.mxu0 0.0
    %714 = vmatpush1.msra.mxu0 0.0
    %715 = vmatprep.subr.mxu0 0.0
    %716 = vmatpush1.msra.mxu0 0.0
    %717 = vmatprep.mubr.f32.mxu0 0.0
    %718 = vmatmul.mubr.f32.gmra.mrb[0].mxu0 %v651
    %v719 = vpop.f32.mrb[0].mxu0
    %v720 = vadd.f32 0.0, %v719
    %v721 = vpop.f32.mrb[0].mxu0
    %722 = vdwg.mxu0
    %724 = vset.pattern.permute.xlu0 0
    %725 = vperm.xlu0 %724, %v634
    %v726 = vpop.permute.xlu0 %725
    %729 = vset.pattern.permute.xlu0 0
    %730 = vperm.xlu0 %729, %v636
    %v731 = vpop.permute.xlu0 %730
    %734 = vset.pattern.permute.xlu0 0
    %735 = vperm.xlu0 %734, %v638
    %v736 = vpop.permute.xlu0 %735
    %739 = vset.pattern.permute.xlu0 0
    %740 = vperm.xlu0 %739, %v640
    %v741 = vpop.permute.xlu0 %740
    %744 = vset.pattern.permute.xlu0 0
    %745 = vperm.xlu0 %744, %v642
    %v746 = vpop.permute.xlu0 %745
    %749 = vset.pattern.permute.xlu0 0
    %750 = vperm.xlu0 %749, %v644
    %v751 = vpop.permute.xlu0 %750
    %754 = vset.pattern.permute.xlu0 0
    %755 = vperm.xlu0 %754, %v646
    %v756 = vpop.permute.xlu0 %755
    %759 = vset.pattern.permute.xlu0 0
    %760 = vperm.xlu0 %759, %v648
    %v761 = vpop.permute.xlu0 %760
    %v763 = vmul.f32 %v30, %v726
    %v764 = vmul.f32 %v31, %v731
    %v765 = vmul.f32 %v32, %v736
    %v766 = vmul.f32 %v33, %v741
    %v767 = vmul.f32 %v34, %v746
    %v768 = vmul.f32 %v35, %v751
    %v769 = vmul.f32 %v36, %v756
    %v770 = vmul.f32 %v37, %v761
    %771 = vmatprep.subr.mxu0 0.0
    %772 = vmatpush1.msra.mxu0 %v763
    %773 = vmatprep.subr.mxu0 0.0
    %774 = vmatpush1.msra.mxu0 %v764
    %775 = vmatprep.subr.mxu0 0.0
    %776 = vmatpush1.msra.mxu0 %v765
    %777 = vmatprep.subr.mxu0 0.0
    %778 = vmatpush1.msra.mxu0 %v766
    %779 = vmatprep.subr.mxu0 0.0
    %780 = vmatpush1.msra.mxu0 %v767
    %781 = vmatprep.subr.mxu0 0.0
    %782 = vmatpush1.msra.mxu0 %v768
    %783 = vmatprep.subr.mxu0 0.0
    %784 = vmatpush1.msra.mxu0 %v769
    %785 = vmatprep.subr.mxu0 0.0
    %786 = vmatpush1.msra.mxu0 %v770
    %787 = vmatprep.subr.mxu0 0.0
    %788 = vmatpush1.msra.mxu0 0.0
    %789 = vmatprep.subr.mxu0 0.0
    %790 = vmatpush1.msra.mxu0 0.0
    %791 = vmatprep.subr.mxu0 0.0
    %792 = vmatpush1.msra.mxu0 0.0
    %793 = vmatprep.subr.mxu0 0.0
    %794 = vmatpush1.msra.mxu0 0.0
    %795 = vmatprep.subr.mxu0 0.0
    %796 = vmatpush1.msra.mxu0 0.0
    %797 = vmatprep.subr.mxu0 0.0
    %798 = vmatpush1.msra.mxu0 0.0
    %799 = vmatprep.subr.mxu0 0.0
    %800 = vmatpush1.msra.mxu0 0.0
    %801 = vmatprep.subr.mxu0 0.0
    %802 = vmatpush1.msra.mxu0 0.0
    %803 = vmatprep.subr.mxu0 0.0
    %804 = vmatpush1.msra.mxu0 0.0
    %805 = vmatprep.subr.mxu0 0.0
    %806 = vmatpush1.msra.mxu0 0.0
    %807 = vmatprep.subr.mxu0 0.0
    %808 = vmatpush1.msra.mxu0 0.0
    %809 = vmatprep.subr.mxu0 0.0
    %810 = vmatpush1.msra.mxu0 0.0
    %811 = vmatprep.subr.mxu0 0.0
    %812 = vmatpush1.msra.mxu0 0.0
    %813 = vmatprep.subr.mxu0 0.0
    %814 = vmatpush1.msra.mxu0 0.0
    %815 = vmatprep.subr.mxu0 0.0
    %816 = vmatpush1.msra.mxu0 0.0
    %817 = vmatprep.subr.mxu0 0.0
    %818 = vmatpush1.msra.mxu0 0.0
    %819 = vmatprep.subr.mxu0 0.0
    %820 = vmatpush1.msra.mxu0 0.0
    %821 = vmatprep.subr.mxu0 0.0
    %822 = vmatpush1.msra.mxu0 0.0
    %823 = vmatprep.subr.mxu0 0.0
    %824 = vmatpush1.msra.mxu0 0.0
    %825 = vmatprep.subr.mxu0 0.0
    %826 = vmatpush1.msra.mxu0 0.0
    %827 = vmatprep.subr.mxu0 0.0
    %828 = vmatpush1.msra.mxu0 0.0
    %829 = vmatprep.subr.mxu0 0.0
    %830 = vmatpush1.msra.mxu0 0.0
    %831 = vmatprep.subr.mxu0 0.0
    %832 = vmatpush1.msra.mxu0 0.0
    %833 = vmatprep.subr.mxu0 0.0
    %834 = vmatpush1.msra.mxu0 0.0
    %835 = vmatprep.mubr.f32.mxu0 0.0
    %836 = vmatmul.mubr.f32.gmra.mrb[0].mxu0 %v651
    %v837 = vpop.f32.mrb[0].mxu0
    %v838 = vadd.f32 0.0, %v837
    %v839 = vpop.f32.mrb[0].mxu0
    %840 = vdwg.mxu0
    %v841 = vmax.f32 %v720, 1e-30
    %v842 = vrcp.pop %v841
    %v843 = vmul.f32 %v841, %v842
    %v844 = vsub.f32 2.0, %v843
    %v845 = vmul.f32 %v842, %v844
    %847 = vset.pattern.permute.xlu0 0
    %848 = vperm.xlu0 %847, %v845
    %v849 = vpop.permute.xlu0 %848
    %v851 = vmul.f32 %v838, %v849
    %v852 = vld [vmem:[%s7] sm:$0xff]
    %v853 = vld [vmem:[%s7 + $0x8] sm:$0xff]
    %v854 = vld [vmem:[%s7 + $0x10] sm:$0xff]
    %v855 = vld [vmem:[%s7 + $0x18] sm:$0xff]
    %v856 = vld [vmem:[%s7 + $0x20] sm:$0xff]
    %v857 = vld [vmem:[%s7 + $0x28] sm:$0xff]
    %v858 = vld [vmem:[%s7 + $0x30] sm:$0xff]
    %v859 = vld [vmem:[%s7 + $0x38] sm:$0xff]
    %v860 = vld [vmem:[%s7 + $0x40] sm:$0xff]
    %v861 = vld [vmem:[%s7 + $0x48] sm:$0xff]
    %v862 = vld [vmem:[%s7 + $0x50] sm:$0xff]
    %v863 = vld [vmem:[%s7 + $0x58] sm:$0xff]
    %v864 = vld [vmem:[%s7 + $0x60] sm:$0xff]
    %v865 = vld [vmem:[%s7 + $0x68] sm:$0xff]
    %v866 = vld [vmem:[%s7 + $0x70] sm:$0xff]
    %v867 = vld [vmem:[%s7 + $0x78] sm:$0xff]
    %868 = vmatprep.subr.mxu0 %v861
    %869 = vmatpush1.msra.mxu0 %v860
    %870 = vmatprep.subr.mxu0 %v863
    %871 = vmatpush1.msra.mxu0 %v862
    %872 = vmatprep.subr.mxu0 %v865
    %873 = vmatpush1.msra.mxu0 %v864
    %874 = vmatprep.subr.mxu0 %v867
    %875 = vmatpush1.msra.mxu0 %v866
    %876 = vmatprep.subr.mxu0 0.0
    %877 = vmatpush1.msra.mxu0 0.0
    %878 = vmatprep.subr.mxu0 0.0
    %879 = vmatpush1.msra.mxu0 0.0
    %880 = vmatprep.subr.mxu0 0.0
    %881 = vmatpush1.msra.mxu0 0.0
    %882 = vmatprep.subr.mxu0 0.0
    %883 = vmatpush1.msra.mxu0 0.0
    %884 = vmatprep.subr.mxu0 0.0
    %885 = vmatpush1.msra.mxu0 0.0
    %886 = vmatprep.subr.mxu0 0.0
    %887 = vmatpush1.msra.mxu0 0.0
    %888 = vmatprep.subr.mxu0 0.0
    %889 = vmatpush1.msra.mxu0 0.0
    %890 = vmatprep.subr.mxu0 0.0
    %891 = vmatpush1.msra.mxu0 0.0
    %892 = vmatprep.subr.mxu0 0.0
    %893 = vmatpush1.msra.mxu0 0.0
    %894 = vmatprep.subr.mxu0 0.0
    %895 = vmatpush1.msra.mxu0 0.0
    %896 = vmatprep.subr.mxu0 0.0
    %897 = vmatpush1.msra.mxu0 0.0
    %898 = vmatprep.subr.mxu0 0.0
    %899 = vmatpush1.msra.mxu0 0.0
    %900 = vmatprep.subr.mxu0 0.0
    %901 = vmatpush1.msra.mxu0 0.0
    %902 = vmatprep.subr.mxu0 0.0
    %903 = vmatpush1.msra.mxu0 0.0
    %904 = vmatprep.subr.mxu0 0.0
    %905 = vmatpush1.msra.mxu0 0.0
    %906 = vmatprep.subr.mxu0 0.0
    %907 = vmatpush1.msra.mxu0 0.0
    %908 = vmatprep.subr.mxu0 0.0
    %909 = vmatpush1.msra.mxu0 0.0
    %910 = vmatprep.subr.mxu0 0.0
    %911 = vmatpush1.msra.mxu0 0.0
    %912 = vmatprep.subr.mxu0 0.0
    %913 = vmatpush1.msra.mxu0 0.0
    %914 = vmatprep.subr.mxu0 0.0
    %915 = vmatpush1.msra.mxu0 0.0
    %916 = vmatprep.subr.mxu0 0.0
    %917 = vmatpush1.msra.mxu0 0.0
    %918 = vmatprep.subr.mxu0 0.0
    %919 = vmatpush1.msra.mxu0 0.0
    %920 = vmatprep.subr.mxu0 0.0
    %921 = vmatpush1.msra.mxu0 0.0
    %922 = vmatprep.subr.mxu0 0.0
    %923 = vmatpush1.msra.mxu0 0.0
    %924 = vmatprep.subr.mxu0 0.0
    %925 = vmatpush1.msra.mxu0 0.0
    %926 = vmatprep.subr.mxu0 0.0
    %927 = vmatpush1.msra.mxu0 0.0
    %928 = vmatprep.subr.mxu0 0.0
    %929 = vmatpush1.msra.mxu0 0.0
    %930 = vmatprep.subr.mxu0 0.0
    %931 = vmatpush1.msra.mxu0 0.0
    %932 = vmatprep.mubr.f32.mxu0 0.0
    %933 = vmatmul.mubr.f32.gmra.mrb[0].mxu0 %v56
    %v934 = vpop.f32.mrb[0].mxu0
    %v935 = vadd.f32 0.0, %v934
    %v936 = vpop.f32.mrb[0].mxu0
    %v937 = vadd.f32 0.0, %v936
    %938 = vdwg.mxu0
    %v940 = vsel %vm54, %v851, 0
    %942 = vmatprep.subr.mxu0 %v853
    %943 = vmatpush1.msra.mxu0 %v852
    %944 = vmatprep.subr.mxu0 %v855
    %945 = vmatpush1.msra.mxu0 %v854
    %946 = vmatprep.subr.mxu0 %v857
    %947 = vmatpush1.msra.mxu0 %v856
    %948 = vmatprep.subr.mxu0 %v859
    %949 = vmatpush1.msra.mxu0 %v858
    %950 = vmatprep.subr.mxu0 0.0
    %951 = vmatpush1.msra.mxu0 0.0
    %952 = vmatprep.subr.mxu0 0.0
    %953 = vmatpush1.msra.mxu0 0.0
    %954 = vmatprep.subr.mxu0 0.0
    %955 = vmatpush1.msra.mxu0 0.0
    %956 = vmatprep.subr.mxu0 0.0
    %957 = vmatpush1.msra.mxu0 0.0
    %958 = vmatprep.subr.mxu0 0.0
    %959 = vmatpush1.msra.mxu0 0.0
    %960 = vmatprep.subr.mxu0 0.0
    %961 = vmatpush1.msra.mxu0 0.0
    %962 = vmatprep.subr.mxu0 0.0
    %963 = vmatpush1.msra.mxu0 0.0
    %964 = vmatprep.subr.mxu0 0.0
    %965 = vmatpush1.msra.mxu0 0.0
    %966 = vmatprep.subr.mxu0 0.0
    %967 = vmatpush1.msra.mxu0 0.0
    %968 = vmatprep.subr.mxu0 0.0
    %969 = vmatpush1.msra.mxu0 0.0
    %970 = vmatprep.subr.mxu0 0.0
    %971 = vmatpush1.msra.mxu0 0.0
    %972 = vmatprep.subr.mxu0 0.0
    %973 = vmatpush1.msra.mxu0 0.0
    %974 = vmatprep.subr.mxu0 0.0
    %975 = vmatpush1.msra.mxu0 0.0
    %976 = vmatprep.subr.mxu0 0.0
    %977 = vmatpush1.msra.mxu0 0.0
    %978 = vmatprep.subr.mxu0 0.0
    %979 = vmatpush1.msra.mxu0 0.0
    %980 = vmatprep.subr.mxu0 0.0
    %981 = vmatpush1.msra.mxu0 0.0
    %982 = vmatprep.subr.mxu0 0.0
    %983 = vmatpush1.msra.mxu0 0.0
    %984 = vmatprep.subr.mxu0 0.0
    %985 = vmatpush1.msra.mxu0 0.0
    %986 = vmatprep.subr.mxu0 0.0
    %987 = vmatpush1.msra.mxu0 0.0
    %988 = vmatprep.subr.mxu0 0.0
    %989 = vmatpush1.msra.mxu0 0.0
    %990 = vmatprep.subr.mxu0 0.0
    %991 = vmatpush1.msra.mxu0 0.0
    %992 = vmatprep.subr.mxu0 0.0
    %993 = vmatpush1.msra.mxu0 0.0
    %994 = vmatprep.subr.mxu0 0.0
    %995 = vmatpush1.msra.mxu0 0.0
    %996 = vmatprep.subr.mxu0 0.0
    %997 = vmatpush1.msra.mxu0 0.0
    %998 = vmatprep.subr.mxu0 0.0
    %999 = vmatpush1.msra.mxu0 0.0
    %1000 = vmatprep.subr.mxu0 0.0
    %1001 = vmatpush1.msra.mxu0 0.0
    %1002 = vmatprep.subr.mxu0 0.0
    %1003 = vmatpush1.msra.mxu0 0.0
    %1004 = vmatprep.subr.mxu0 0.0
    %1005 = vmatpush1.msra.mxu0 0.0
    %1006 = vmatprep.mubr.f32.mxu0 0.0
    %1007 = vmatmul.mubr.f32.gmra.mrb[0].mxu0 %v940
    %v1008 = vpop.f32.mrb[0].mxu0
    %v1009 = vadd.f32 %v935, %v1008
    %v1010 = vpop.f32.mrb[0].mxu0
    %v1011 = vadd.f32 %v937, %v1010
    %1012 = vdwg.mxu0
    %v1013 = vadd.s32 %v129, 128
    %v1014 = vld [vmem:[%s2] sm:$0xff]
    %1015 = vset.pattern.permute.xlu0 0
    %1016 = vperm.xlu0 %1015, %v1014
    %v1017 = vpop.permute.xlu0 %1016
    %vm1018 = vcmp.eq.s32.totalorder %v129, %v1017
    %vm1019 = vcmp.eq.s32.totalorder %v1013, %v1017
    %1020 = vset.pattern.permute.xlu0 1
    %1021 = vperm.xlu0 %1020, %v1014
    %v1022 = vpop.permute.xlu0 %1021
    %vm1023 = vcmp.eq.s32.totalorder %v129, %v1022
    %vm1024 = vcmp.eq.s32.totalorder %v1013, %v1022
    %vm1025 = vmor %vm1018, %vm1023
    %vm1026 = vmor %vm1019, %vm1024
    %1027 = vset.pattern.permute.xlu0 2
    %1028 = vperm.xlu0 %1027, %v1014
    %v1029 = vpop.permute.xlu0 %1028
    %vm1030 = vcmp.eq.s32.totalorder %v129, %v1029
    %vm1031 = vcmp.eq.s32.totalorder %v1013, %v1029
    %vm1032 = vmor %vm1025, %vm1030
    %vm1033 = vmor %vm1026, %vm1031
    %1034 = vset.pattern.permute.xlu0 3
    %1035 = vperm.xlu0 %1034, %v1014
    %v1036 = vpop.permute.xlu0 %1035
    %vm1037 = vcmp.eq.s32.totalorder %v129, %v1036
    %vm1038 = vcmp.eq.s32.totalorder %v1013, %v1036
    %vm1039 = vmor %vm1032, %vm1037
    %vm1040 = vmor %vm1033, %vm1038
    %1041 = vset.pattern.permute.xlu0 4
    %1042 = vperm.xlu0 %1041, %v1014
    %v1043 = vpop.permute.xlu0 %1042
    %vm1044 = vcmp.eq.s32.totalorder %v129, %v1043
    %vm1045 = vcmp.eq.s32.totalorder %v1013, %v1043
    %vm1046 = vmor %vm1039, %vm1044
    %vm1047 = vmor %vm1040, %vm1045
    %1048 = vset.pattern.permute.xlu0 5
    %1049 = vperm.xlu0 %1048, %v1014
    %v1050 = vpop.permute.xlu0 %1049
    %vm1051 = vcmp.eq.s32.totalorder %v129, %v1050
    %vm1052 = vcmp.eq.s32.totalorder %v1013, %v1050
    %vm1053 = vmor %vm1046, %vm1051
    %vm1054 = vmor %vm1047, %vm1052
    %1055 = vset.pattern.permute.xlu0 6
    %1056 = vperm.xlu0 %1055, %v1014
    %v1057 = vpop.permute.xlu0 %1056
    %vm1058 = vcmp.eq.s32.totalorder %v129, %v1057
    %vm1059 = vcmp.eq.s32.totalorder %v1013, %v1057
    %vm1060 = vmor %vm1053, %vm1058
    %vm1061 = vmor %vm1054, %vm1059
    %1062 = vset.pattern.permute.xlu0 7
    %1063 = vperm.xlu0 %1062, %v1014
    %v1064 = vpop.permute.xlu0 %1063
    %vm1065 = vcmp.eq.s32.totalorder %v129, %v1064
    %vm1066 = vcmp.eq.s32.totalorder %v1013, %v1064
    %vm1067 = vmor %vm1060, %vm1065
    %vm1068 = vmor %vm1061, %vm1066
    %v1069 = vadd.f32 %v1009, -1e+09
    %v1070 = vadd.f32 %v1011, -1e+09
    %v1071 = vsel %vm1067, %v1069, %v1009
    %v1072 = vsel %vm1068, %v1070, %v1011
    %v1073 = vmax.f32 %v1071, %v1072
    %1074 = vmax.xlane.f32.xlu0 %v1073
    %v1075 = vpop.xlane.xlu0 %1074
    %v1076 = vsub.f32 %v1071, %v1075
    %v1077 = vsub.f32 %v1072, %v1075
    %v1078 = vmul.f32 %v1076, 1.442695
    %v1079 = vpow.pop %v1078
    %v1080 = vmul.f32 %v1077, 1.442695
    %v1081 = vpow.pop %v1080
    %v1082 = vadd.f32 %v1079, %v1081
    %1083 = vadd.xlane.f32.xlu0 %v1082
    %v1084 = vpop.xlane.xlu0 %1083
    %v1085 = vrcp.pop %v1084
    %v1086 = vmul.f32 %v1084, %v1085
    %v1087 = vsub.f32 2.0, %v1086
    %v1088 = vmul.f32 %v1085, %v1087
    %v1089 = vmul.f32 %v1079, %v1088
    %v1090 = vmul.f32 %v1081, %v1088
    %1091 = vst [vmem:[#allocation2] sm:$0xff] %v1089
    %1092 = vst [vmem:[#allocation2 + $0x8] sm:$0xff] %v1090
    // Predicated region
    $region34: #{tpu_custom_call.1} parent=1 // pred_check
      _
    $region35: #{tpu_custom_call.1} parent=1 // pred_check_branch
      %1094 = sbr.rel (0) target = $region37
    $region36: #{tpu_custom_call.1} parent=1 // pred_region
      %s1096 = ssub.s32 256, 256
      %1097 = vsyncadd [#allocation3], %s1096
      %s1099 = sshll.u32 [#allocation2], 4
      %s1100 = int_to_ptr.vmem [resolvable:$true] %s1099
      %1102 = dma.vmem_to_hbm [thread:$0]  %s1100, 256, %s8, [#allocation3]
    $region37: #{tpu_custom_call.1} parent=1 // pred_fallthru
      _
    // Predicated region
    $region38: #{tpu_custom_call.1} parent=1 // pred_check
      _
    $region39: #{tpu_custom_call.1} parent=1 // pred_check_branch
      %1104 = sbr.rel (0) target = $region41
    $region40: #{tpu_custom_call.1} parent=1 // pred_region
      %1105 = dma.done [#allocation3], 256
    $region41: #{tpu_custom_call.1} parent=1 // pred_fallthru
      _
    %1106 = vsyncpa [#allocation3], 1

</llo_original>
